<compile_context>
chip_gen: v7x
topology: tpu7x:2x2x1
jax: 0.10.0
libtpu: 0.0.40
codegen_flags: <defaults>
</compile_context>

<pallas_src>
import jax
import jax.numpy as jnp
from jax.experimental import pallas as pl
from jax.experimental.pallas import tpu as pltpu

IN_FEATS = 784   # 28 * 28 * 1
HID = 20         # fc1 out_features; forward returns log_softmax over these 20 units

TB_MAX = 2048                    # max batch-tile rows (x tile: 2048*784*4 B ~= 6.3 MiB, x2 buffers)
SMALL_BATCH_ONE_TILE = 1024      # below this, a single tile (per-step overhead not worth splitting)
VMEM_LIMIT_BYTES = 32 * 1024 * 1024


# ---------------- Pallas kernel ----------------
def fcnet_kernel(x_ref, w_ref, b_ref, out_ref):
    """Fused fc1 -> relu -> (dropout=id) -> relu -> log_softmax.

    x_ref  : (TB, 784)  VMEM   flattened input batch tile (f32 or bf16)
    w_ref  : (784, 20)  bf16   fc1.weight, pre-transposed
    b_ref  : (1, 20)    f32    fc1.bias
    out_ref: (TB, 20)   f32    log-probabilities
    """
    xb = x_ref[...].astype(jnp.bfloat16)          # no-op if input is already bf16
    h = jnp.dot(xb, w_ref[...], preferred_element_type=jnp.float32) + b_ref[...]
    h = jnp.maximum(h, 0.0)                       # relu (dropout=id in eval; 2nd relu is a no-op)
    m = jnp.max(h, axis=-1, keepdims=True)        # numerically stable log_softmax over 20 features
    s = h - m
    lse = jnp.log(jnp.sum(jnp.exp(s), axis=-1, keepdims=True))
    out_ref[...] = s - lse


# ---------------- tiling policy ----------------
def _round_up(x, m):
    return ((x + m - 1) // m) * m


def _choose_tb(B, tb_max=TB_MAX):
    """Pick the batch-tile size.

    - Small batch: one tile covering the whole batch (tb == B trivially satisfies the (8,128) rule
      and splitting tiny batches across TCs costs more in per-step overhead than it gains).
    - Large batch: >= 2 tiles (even count while it matters) so both v7x TensorCores get balanced
      work; each tile a multiple of 256 rows (full MXU M-dim on v6e/v7x), capped at tb_max so the
      double-buffered x tiles stay well inside VMEM on all generations.
    """
    if B < SMALL_BATCH_ONE_TILE:
        return B if B <= tb_max else max(8, (tb_max // 8) * 8)
    n = max(2, pl.cdiv(B, tb_max))
    if n % 2:
        n += 1
    return min(tb_max, _round_up(pl.cdiv(B, n), 256))


# ---------------- wrapper ----------------
def fcnet_forward(x, params, *, tb_max=TB_MAX):
    """x: (B, 1, 28, 28) (anything that flattens to 784 features per row), f32 or bf16.

    params = (w1_t, b1) with w1_t = fc1.weight.T in bf16, shape (784, 20) (transposed + cast ONCE
    at parameter-prep time, not per call) and b1 f32 of shape (1, 20)."""
    w1_t, b1 = params
    B = x.shape[0]
    xf = x.reshape(B, IN_FEATS)   # torch.flatten(x, start_dim=1): contiguous reshape, free

    tb = _choose_tb(B, tb_max)
    grid = (pl.cdiv(B, tb),)

    cost = pl.CostEstimate(
        flops=2 * B * IN_FEATS * HID,
        transcendentals=B * (HID + 1),  # exp per logit + one log per row
        bytes_accessed=(B * IN_FEATS * xf.dtype.itemsize
                        + IN_FEATS * HID * w1_t.dtype.itemsize
                        + HID * 4
                        + B * HID * 4),
    )

    return pl.pallas_call(
        fcnet_kernel,
        out_shape=jax.ShapeDtypeStruct((B, HID), jnp.float32),
        grid_spec=pltpu.PrefetchScalarGridSpec(
            num_scalar_prefetch=0,
            grid=grid,
            in_specs=[
                pl.BlockSpec((tb, IN_FEATS), lambda i: (i, 0)),    # batch-tiled, lane-dense activations
                pl.BlockSpec((IN_FEATS, HID), lambda i: (0, 0)),   # weights resident across grid steps
                pl.BlockSpec((1, HID), lambda i: (0, 0)),          # bias resident across grid steps
            ],
            out_specs=pl.BlockSpec((tb, HID), lambda i: (i, 0)),
        ),
        compiler_params=pltpu.CompilerParams(
            dimension_semantics=("parallel",),        # batch tiles shard across v7x's two TCs
            vmem_limit_bytes=VMEM_LIMIT_BYTES,        # covers tb=2048 double-buffered x on v5e's 16 MiB default
        ),
        cost_estimate=cost,
    )(xf, w1_t, b1)


def prepare_params(w1, b1):
    """PyTorch-layout fc1.weight (20,784) f32 / fc1.bias (20,) f32 -> kernel params.
    Transpose + bf16 cast happen ONCE here, never per call."""
    return (jnp.asarray(w1.T, dtype=jnp.bfloat16),
            jnp.asarray(b1, dtype=jnp.float32).reshape(1, HID))


# ---------------- pure-JAX references (correctness checks) ----------------
def reference_forward_f32(x, torch_params):
    """Exact PyTorch semantics in f32 (torch_params = (fc1.weight (20,784), fc1.bias (20,)))."""
    w1, b1 = torch_params
    xf = x.reshape(x.shape[0], -1)
    h = xf @ w1.T + b1
    h = jnp.maximum(h, 0.0)       # relu
    # dropout1 -> identity (eval mode)
    h = jnp.maximum(h, 0.0)       # second relu
    return jax.nn.log_softmax(h, axis=1)


def reference_forward_bf16(x, params):
    """Same arithmetic as the kernel (bf16 operands, f32 accumulation) for a tight comparison."""
    w1_t, b1 = params
    xf = x.reshape(x.shape[0], -1).astype(jnp.bfloat16)
    h = jnp.dot(xf, w1_t, preferred_element_type=jnp.float32) + b1
    h = jnp.maximum(h, 0.0)
    return jax.nn.log_softmax(h, axis=1)


if __name__ == "__main__":
    key = jax.random.PRNGKey(0)
    ks = jax.random.split(key, 4)

    # deterministic synthetic parameters (shapes from fcNet.__init__; fc2 is unused in forward)
    w1 = 0.05 * jax.random.normal(ks[0], (HID, IN_FEATS), jnp.float32)   # fc1.weight (20, 784)
    b1 = 0.10 * jax.random.normal(ks[1], (HID,), jnp.float32)            # fc1.bias   (20,)

    params = prepare_params(w1, b1)       # (784,20) bf16, (1,20) f32
    torch_params = (w1, b1)

    fwd = jax.jit(fcnet_forward)

    # --- small input consistent with 784 in-features: (B=2, C=1, 28, 28), single-tile path ---
    x_small = jax.random.normal(ks[2], (2, 1, 28, 28), jnp.float32)
    out_small = jax.block_until_ready(fwd(x_small, params))
    assert out_small.shape == (2, HID)

    err_exact = float(jnp.max(jnp.abs(out_small - reference_forward_bf16(x_small, params))))
    assert err_exact < 2e-3, f"mismatch vs bf16-matched reference: max abs err = {err_exact}"

    err_f32 = float(jnp.max(jnp.abs(out_small - reference_forward_f32(x_small, torch_params))))
    assert err_f32 < 5e-2, f"mismatch vs f32 reference (bf16 matmul tolerance): max abs err = {err_f32}"

    # --- multi-tile path: grid of 2 balanced batch tiles + ragged last tile (exercises masking) ---
    Bm = 1040
    x_big = jax.random.normal(ks[3], (Bm, 1, 28, 28), jnp.float32)
    out_big = jax.block_until_ready(fwd(x_big, params))
    assert out_big.shape == (Bm, HID)
    err_big = float(jnp.max(jnp.abs(out_big - reference_forward_bf16(x_big, params))))
    assert err_big < 2e-3, f"multi-tile mismatch vs bf16-matched reference: max abs err = {err_big}"
    assert bool(jnp.all(jnp.isfinite(out_big)))

    print("KERNEL_OK")
</pallas_src>

<mosaic_0001>
module attributes {stable_mosaic.version = 11 : i64} {
  func.func @fcnet_kernel(%arg0: i32, %arg1: memref<2x784xf32, #tpu.memory_space<vmem>>, %arg2: memref<784x20xbf16, #tpu.memory_space<vmem>>, %arg3: memref<1x20xf32, #tpu.memory_space<vmem>>, %arg4: memref<2x20xf32, #tpu.memory_space<vmem>>) attributes {dimension_semantics = [#tpu.dimension_semantics<parallel>], iteration_bounds = array<i64: 1>, scalar_prefetch = 0 : i64, scratch_operands = 0 : i64, tpu.core_type = #tpu.core_type<tc>, window_params = [{transform_indices = @transform_0, window_bounds = array<i64: 2, 784>}, {pipeline_mode = #tpu.pipeline_mode<synchronous>, transform_indices = @transform_1, window_bounds = array<i64: 784, 20>}, {pipeline_mode = #tpu.pipeline_mode<synchronous>, transform_indices = @transform_2, window_bounds = array<i64: 1, 20>}, {transform_indices = @transform_3, window_bounds = array<i64: 2, 20>}]} {
    %c0 = arith.constant 0 : index
    %c0_0 = arith.constant 0 : index
    %0 = vector.load %arg1[%c0, %c0_0] : memref<2x784xf32, #tpu.memory_space<vmem>>, vector<2x784xf32>
    %1 = arith.truncf %0 : vector<2x784xf32> to vector<2x784xbf16>
    %c0_1 = arith.constant 0 : index
    %c0_2 = arith.constant 0 : index
    %2 = vector.load %arg2[%c0_1, %c0_2] : memref<784x20xbf16, #tpu.memory_space<vmem>>, vector<784x20xbf16>
    %cst = arith.constant dense<0.000000e+00> : vector<2x20xf32>
    %3 = tpu.matmul %1, %2, %cst {dimension_numbers = #tpu.dot_dimension_numbers<[1], [0], [0], [1], [0, 0, 1, 1], [], []>} : vector<2x784xbf16>, vector<784x20xbf16>, vector<2x20xf32> -> vector<2x20xf32>
    %c0_3 = arith.constant 0 : index
    %c0_4 = arith.constant 0 : index
    %4 = vector.load %arg3[%c0_3, %c0_4] : memref<1x20xf32, #tpu.memory_space<vmem>>, vector<1x20xf32>
    %5 = vector.broadcast %4 : vector<1x20xf32> to vector<2x20xf32>
    %6 = arith.addf %3, %5 : vector<2x20xf32>
    %cst_5 = arith.constant 0.000000e+00 : f32
    %7 = vector.broadcast %cst_5 : f32 to vector<2x20xf32>
    %8 = arith.maximumf %6, %7 : vector<2x20xf32>
    %cst_6 = arith.constant dense<0xFF800000> : vector<2xf32>
    %9 = vector.multi_reduction <maximumf>, %8, %cst_6 [1] : vector<2x20xf32> to vector<2xf32>
    %10 = vector.shape_cast %9 : vector<2xf32> to vector<2x1xf32>
    %11 = vector.broadcast %10 : vector<2x1xf32> to vector<2x20xf32>
    %12 = arith.subf %8, %11 : vector<2x20xf32>
    %13 = math.exp %12 : vector<2x20xf32>
    %cst_7 = arith.constant dense<0.000000e+00> : vector<2xf32>
    %14 = vector.multi_reduction <add>, %13, %cst_7 [1] : vector<2x20xf32> to vector<2xf32>
    %15 = vector.shape_cast %14 : vector<2xf32> to vector<2x1xf32>
    %16 = math.log %15 : vector<2x1xf32>
    %17 = vector.broadcast %16 : vector<2x1xf32> to vector<2x20xf32>
    %18 = arith.subf %12, %17 : vector<2x20xf32>
    %c0_8 = arith.constant 0 : index
    %c0_9 = arith.constant 0 : index
    %19 = vector.load %arg4[%c0_8, %c0_9] : memref<2x20xf32, #tpu.memory_space<vmem>>, vector<2x20xf32>
    tpu.vector_store %arg4[%c0_8, %c0_9], %18 {strides = array<i32>} : memref<2x20xf32, #tpu.memory_space<vmem>>, vector<2x20xf32>,
    return
  }
  func.func @transform_0(%arg0: i32) -> (i32, i32) {
    %c0_i32 = arith.constant 0 : i32
    %c0_i32_0 = arith.constant 0 : i32
    return %arg0, %c0_i32 : i32, i32
  }
  func.func @transform_1(%arg0: i32) -> (i32, i32) {
    %c0_i32 = arith.constant 0 : i32
    %c0_i32_0 = arith.constant 0 : i32
    %c0_i32_1 = arith.constant 0 : i32
    return %c0_i32, %c0_i32_0 : i32, i32
  }
  func.func @transform_2(%arg0: i32) -> (i32, i32) {
    %c0_i32 = arith.constant 0 : i32
    %c0_i32_0 = arith.constant 0 : i32
    %c0_i32_1 = arith.constant 0 : i32
    return %c0_i32, %c0_i32_0 : i32, i32
  }
  func.func @transform_3(%arg0: i32) -> (i32, i32) {
    %c0_i32 = arith.constant 0 : i32
    %c0_i32_0 = arith.constant 0 : i32
    return %arg0, %c0_i32 : i32, i32
  }
}

</mosaic_0001>

<llo_original>
// kernel: fcnet_forward.1
$region0: #{fcnet_forward.1}
  #allocation0 [shape = 'u32[]', space=smem, size = 0x4, offset = 0x4, fixed_abs, tag = 'smem constant byte address 0x4 - core index']
  #allocation1 [shape = 'u32[144,128]{1,0:T(1,128)}', space=vmem, size = 0x12000, scoped, tag = 'internal scratch']
  %s0 = inlined_call_operand.vmem [shape: f32[2,784], index: 0, kind: input, shape index: {}]
  %s1 = inlined_call_operand.vmem [shape: bf16[784,20], index: 1, kind: input, shape index: {}]
  %s2 = inlined_call_operand.vmem [shape: f32[1,20], index: 2, kind: input, shape index: {}]
  %s3 = inlined_call_operand.hbm [shape: f32[2,20], index: 3, kind: output, shape index: {}]
  %s4 = sld [smem:[#allocation0]]
  $region22: #{fcnet_forward.1} parent=0
    _
  %s6 = ssub.s32 1, %s4
  %s7 = scalar_select 0, %s6, %s4
  $region1: #{fcnet_forward.1} parent=0
    #allocation2 [shape = 'u8[1024]{0}', space=vmem, size = 0x400, scoped, tag = 'output window, operand 0, single buffered']
    #allocation3 [shape = 's32[1]{0}', space=sflag, size = 0x4, scoped, tag = 'scoped memory for fcnet_forward.1']
    %8 = vsyncpa [#allocation3], 0
    // Predicated region
    $region2: #{fcnet_forward.1} parent=1 // pred_check
      _
    $region3: #{fcnet_forward.1} parent=1 // pred_check_branch
      %10 = sbr.rel (0) target = $region5
    $region4: #{fcnet_forward.1} parent=1 // pred_region
      _
    $region5: #{fcnet_forward.1} parent=1 // pred_fallthru
      _
    // Predicated region
    $region6: #{fcnet_forward.1} parent=1 // pred_check
      _
    $region7: #{fcnet_forward.1} parent=1 // pred_check_branch
      %12 = sbr.rel (0) target = $region9
    $region8: #{fcnet_forward.1} parent=1 // pred_region
      _
    $region9: #{fcnet_forward.1} parent=1 // pred_fallthru
      _
    // Predicated region
    $region10: #{fcnet_forward.1} parent=1 // pred_check
      _
    $region11: #{fcnet_forward.1} parent=1 // pred_check_branch
      %14 = sbr.rel (0) target = $region13
    $region12: #{fcnet_forward.1} parent=1 // pred_region
      _
    $region13: #{fcnet_forward.1} parent=1 // pred_fallthru
      _
    %v16 = vld [vmem:[%s0] sm:$0xff]
    %v17 = vld [vmem:[%s0 + $0x8] sm:$0x3f]
    %v20 = vcombine.high %v16, %v16
    %v22 = vunpack.c.l.s4 1983009808
    %v23 = vunpack.c.0.s8 %v22
    %v24 = vlaneseq
    %v25 = vshrl.u32 %v24, 7
    %v26 = vsub.s32 %v23, %v25
    %v27 = vrot.slane %v16, %v26
    %v29 = vunpack.c.l.s4 1983009808
    %v30 = vunpack.c.0.s8 %v29
    %v31 = vlaneseq
    %v32 = vshrl.u32 %v31, 7
    %v33 = vsub.s32 %v30, %v32
    %v34 = vrot.slane %v20, %v33
    %v35 = vcombine.high %v27, %v27
    %v36 = vcombine.high %v34, %v34
    %v37 = vcombine.high %v17, %v17
    %v39 = vunpack.c.l.s4 1983009808
    %v40 = vunpack.c.0.s8 %v39
    %v41 = vlaneseq
    %v42 = vshrl.u32 %v41, 7
    %v43 = vsub.s32 %v40, %v42
    %v44 = vrot.slane %v17, %v43
    %v46 = vunpack.c.l.s4 1983009808
    %v47 = vunpack.c.0.s8 %v46
    %v48 = vlaneseq
    %v49 = vshrl.u32 %v48, 7
    %v50 = vsub.s32 %v47, %v49
    %v51 = vrot.slane %v37, %v50
    %v52 = vcombine.high %v44, %v44
    %v60 = vpack.c.bf16 %v27, %v27
    %v61 = vpack.c.bf16 %v35, %v35
    %v62 = vpack.c.bf16 %v34, %v34
    %v63 = vpack.c.bf16 %v36, %v36
    %v64 = vpack.c.bf16 %v44, %v44
    %v65 = vpack.c.bf16 %v52, %v52
    %v66 = vpack.c.bf16 %v51, %v51
    %v67 = vld [vmem:[%s1] sm:$0xf]
    %v68 = vld [vmem:[%s1 + $0x4] sm:$0xf]
    %v69 = vld [vmem:[%s1 + $0x8] sm:$0xf]
    %v70 = vld [vmem:[%s1 + $0xc] sm:$0xf]
    %v71 = vld [vmem:[%s1 + $0x10] sm:$0xf]
    %v72 = vld [vmem:[%s1 + $0x14] sm:$0xf]
    %v73 = vld [vmem:[%s1 + $0x18] sm:$0xf]
    %v74 = vld [vmem:[%s1 + $0x1c] sm:$0xf]
    %v75 = vld [vmem:[%s1 + $0x20] sm:$0xf]
    %v76 = vld [vmem:[%s1 + $0x24] sm:$0xf]
    %v77 = vld [vmem:[%s1 + $0x28] sm:$0xf]
    %v78 = vld [vmem:[%s1 + $0x2c] sm:$0xf]
    %v79 = vld [vmem:[%s1 + $0x30] sm:$0xf]
    %v80 = vld [vmem:[%s1 + $0x34] sm:$0xf]
    %v81 = vld [vmem:[%s1 + $0x38] sm:$0xf]
    %v82 = vld [vmem:[%s1 + $0x3c] sm:$0xf]
    %v83 = vld [vmem:[%s1 + $0x40] sm:$0xf]
    %v84 = vld [vmem:[%s1 + $0x44] sm:$0xf]
    %v85 = vld [vmem:[%s1 + $0x48] sm:$0xf]
    %v86 = vld [vmem:[%s1 + $0x4c] sm:$0xf]
    %v87 = vld [vmem:[%s1 + $0x50] sm:$0xf]
    %v88 = vld [vmem:[%s1 + $0x54] sm:$0xf]
    %v89 = vld [vmem:[%s1 + $0x58] sm:$0xf]
    %v90 = vld [vmem:[%s1 + $0x5c] sm:$0xf]
    %v91 = vld [vmem:[%s1 + $0x60] sm:$0xf]
    %v92 = vld [vmem:[%s1 + $0x64] sm:$0xf]
    %v93 = vld [vmem:[%s1 + $0x68] sm:$0xf]
    %v94 = vld [vmem:[%s1 + $0x6c] sm:$0xf]
    %v95 = vld [vmem:[%s1 + $0x70] sm:$0xf]
    %v96 = vld [vmem:[%s1 + $0x74] sm:$0xf]
    %v97 = vld [vmem:[%s1 + $0x78] sm:$0xf]
    %v98 = vld [vmem:[%s1 + $0x7c] sm:$0xf]
    %v99 = vld [vmem:[%s1 + $0x80] sm:$0xf]
    %v100 = vld [vmem:[%s1 + $0x84] sm:$0xf]
    %v101 = vld [vmem:[%s1 + $0x88] sm:$0xf]
    %v102 = vld [vmem:[%s1 + $0x8c] sm:$0xf]
    %v103 = vld [vmem:[%s1 + $0x90] sm:$0xf]
    %v104 = vld [vmem:[%s1 + $0x94] sm:$0xf]
    %v105 = vld [vmem:[%s1 + $0x98] sm:$0xf]
    %v106 = vld [vmem:[%s1 + $0x9c] sm:$0xf]
    %v107 = vld [vmem:[%s1 + $0xa0] sm:$0xf]
    %v108 = vld [vmem:[%s1 + $0xa4] sm:$0xf]
    %v109 = vld [vmem:[%s1 + $0xa8] sm:$0xf]
    %v110 = vld [vmem:[%s1 + $0xac] sm:$0xf]
    %v111 = vld [vmem:[%s1 + $0xb0] sm:$0xf]
    %v112 = vld [vmem:[%s1 + $0xb4] sm:$0xf]
    %v113 = vld [vmem:[%s1 + $0xb8] sm:$0xf]
    %v114 = vld [vmem:[%s1 + $0xbc] sm:$0xf]
    %v115 = vld [vmem:[%s1 + $0xc0] sm:$0xf]
    %v116 = vld [vmem:[%s1 + $0xc4] sm:$0xf]
    %v117 = vld [vmem:[%s1 + $0xc8] sm:$0xf]
    %v118 = vld [vmem:[%s1 + $0xcc] sm:$0xf]
    %v119 = vld [vmem:[%s1 + $0xd0] sm:$0xf]
    %v120 = vld [vmem:[%s1 + $0xd4] sm:$0xf]
    %v121 = vld [vmem:[%s1 + $0xd8] sm:$0xf]
    %v122 = vld [vmem:[%s1 + $0xdc] sm:$0xf]
    %v123 = vld [vmem:[%s1 + $0xe0] sm:$0xf]
    %v124 = vld [vmem:[%s1 + $0xe4] sm:$0xf]
    %v125 = vld [vmem:[%s1 + $0xe8] sm:$0xf]
    %v126 = vld [vmem:[%s1 + $0xec] sm:$0xf]
    %v127 = vld [vmem:[%s1 + $0xf0] sm:$0xf]
    %v128 = vld [vmem:[%s1 + $0xf4] sm:$0xf]
    %v129 = vld [vmem:[%s1 + $0xf8] sm:$0xf]
    %v130 = vld [vmem:[%s1 + $0xfc] sm:$0xf]
    %v131 = vld [vmem:[%s1 + $0x100] sm:$0xf]
    %v132 = vld [vmem:[%s1 + $0x104] sm:$0xf]
    %v133 = vld [vmem:[%s1 + $0x108] sm:$0xf]
    %v134 = vld [vmem:[%s1 + $0x10c] sm:$0xf]
    %v135 = vld [vmem:[%s1 + $0x110] sm:$0xf]
    %v136 = vld [vmem:[%s1 + $0x114] sm:$0xf]
    %v137 = vld [vmem:[%s1 + $0x118] sm:$0xf]
    %v138 = vld [vmem:[%s1 + $0x11c] sm:$0xf]
    %v139 = vld [vmem:[%s1 + $0x120] sm:$0xf]
    %v140 = vld [vmem:[%s1 + $0x124] sm:$0xf]
    %v141 = vld [vmem:[%s1 + $0x128] sm:$0xf]
    %v142 = vld [vmem:[%s1 + $0x12c] sm:$0xf]
    %v143 = vld [vmem:[%s1 + $0x130] sm:$0xf]
    %v144 = vld [vmem:[%s1 + $0x134] sm:$0xf]
    %v145 = vld [vmem:[%s1 + $0x138] sm:$0xf]
    %v146 = vld [vmem:[%s1 + $0x13c] sm:$0xf]
    %v147 = vld [vmem:[%s1 + $0x140] sm:$0xf]
    %v148 = vld [vmem:[%s1 + $0x144] sm:$0xf]
    %v149 = vld [vmem:[%s1 + $0x148] sm:$0xf]
    %v150 = vld [vmem:[%s1 + $0x14c] sm:$0xf]
    %v151 = vld [vmem:[%s1 + $0x150] sm:$0xf]
    %v152 = vld [vmem:[%s1 + $0x154] sm:$0xf]
    %v153 = vld [vmem:[%s1 + $0x158] sm:$0xf]
    %v154 = vld [vmem:[%s1 + $0x15c] sm:$0xf]
    %v155 = vld [vmem:[%s1 + $0x160] sm:$0xf]
    %v156 = vld [vmem:[%s1 + $0x164] sm:$0xf]
    %v157 = vld [vmem:[%s1 + $0x168] sm:$0xf]
    %v158 = vld [vmem:[%s1 + $0x16c] sm:$0xf]
    %v159 = vld [vmem:[%s1 + $0x170] sm:$0xf]
    %v160 = vld [vmem:[%s1 + $0x174] sm:$0xf]
    %v161 = vld [vmem:[%s1 + $0x178] sm:$0xf]
    %v162 = vld [vmem:[%s1 + $0x17c] sm:$0xf]
    %v163 = vld [vmem:[%s1 + $0x180] sm:$0xf]
    %v164 = vld [vmem:[%s1 + $0x184] sm:$0xf]
    %v165 = vld [vmem:[%s2] sm:$0x1]
    %v167 = vlaneseq
    %v168 = vshrl.u32 %v167, 7
    %v169 = vsub.s32 0, %v168
    %v170 = vrot.slane %v165, %v169
    %v270 = vunpack.c.l.b16 %v67
    %v271 = vunpack.c.l.b16 %v68
    %v272 = vunpack.c.l.b16 %v69
    %v273 = vunpack.c.l.b16 %v70
    %v274 = vunpack.c.l.b16 %v71
    %v275 = vunpack.c.l.b16 %v72
    %v276 = vunpack.c.l.b16 %v73
    %v277 = vunpack.c.l.b16 %v74
    %v278 = vunpack.c.l.b16 %v75
    %v279 = vunpack.c.l.b16 %v76
    %v280 = vunpack.c.l.b16 %v77
    %v281 = vunpack.c.l.b16 %v78
    %v282 = vunpack.c.l.b16 %v79
    %v283 = vunpack.c.l.b16 %v80
    %v284 = vunpack.c.l.b16 %v81
    %v285 = vunpack.c.l.b16 %v82
    %v286 = vunpack.c.l.b16 %v83
    %v287 = vunpack.c.l.b16 %v84
    %v288 = vunpack.c.l.b16 %v85
    %v289 = vunpack.c.l.b16 %v86
    %v290 = vunpack.c.l.b16 %v87
    %v291 = vunpack.c.l.b16 %v88
    %v292 = vunpack.c.l.b16 %v89
    %v293 = vunpack.c.l.b16 %v90
    %v294 = vunpack.c.l.b16 %v91
    %v295 = vunpack.c.l.b16 %v92
    %v296 = vunpack.c.l.b16 %v93
    %v297 = vunpack.c.l.b16 %v94
    %v298 = vunpack.c.l.b16 %v95
    %v299 = vunpack.c.l.b16 %v96
    %v300 = vunpack.c.l.b16 %v97
    %v301 = vunpack.c.l.b16 %v98
    %v302 = vunpack.c.l.b16 %v99
    %v303 = vunpack.c.l.b16 %v100
    %v304 = vunpack.c.l.b16 %v101
    %v305 = vunpack.c.l.b16 %v102
    %v306 = vunpack.c.l.b16 %v103
    %v307 = vunpack.c.l.b16 %v104
    %v308 = vunpack.c.l.b16 %v105
    %v309 = vunpack.c.l.b16 %v106
    %v310 = vunpack.c.l.b16 %v107
    %v311 = vunpack.c.l.b16 %v108
    %v312 = vunpack.c.l.b16 %v109
    %v313 = vunpack.c.l.b16 %v110
    %v314 = vunpack.c.l.b16 %v111
    %v315 = vunpack.c.l.b16 %v112
    %v316 = vunpack.c.l.b16 %v113
    %v317 = vunpack.c.l.b16 %v114
    %v318 = vunpack.c.l.b16 %v115
    %v319 = vunpack.c.l.b16 %v116
    %v320 = vunpack.c.l.b16 %v117
    %v321 = vunpack.c.l.b16 %v118
    %v322 = vunpack.c.l.b16 %v119
    %v323 = vunpack.c.l.b16 %v120
    %v324 = vunpack.c.l.b16 %v121
    %v325 = vunpack.c.l.b16 %v122
    %v326 = vunpack.c.l.b16 %v123
    %v327 = vunpack.c.l.b16 %v124
    %v328 = vunpack.c.l.b16 %v125
    %v329 = vunpack.c.l.b16 %v126
    %v330 = vunpack.c.l.b16 %v127
    %v331 = vunpack.c.l.b16 %v128
    %v332 = vunpack.c.l.b16 %v129
    %v333 = vunpack.c.l.b16 %v130
    %v334 = vunpack.c.l.b16 %v131
    %v335 = vunpack.c.l.b16 %v132
    %v336 = vunpack.c.l.b16 %v133
    %v337 = vunpack.c.l.b16 %v134
    %v338 = vunpack.c.l.b16 %v135
    %v339 = vunpack.c.l.b16 %v136
    %v340 = vunpack.c.l.b16 %v137
    %v341 = vunpack.c.l.b16 %v138
    %v342 = vunpack.c.l.b16 %v139
    %v343 = vunpack.c.l.b16 %v140
    %v344 = vunpack.c.l.b16 %v141
    %v345 = vunpack.c.l.b16 %v142
    %v346 = vunpack.c.l.b16 %v143
    %v347 = vunpack.c.l.b16 %v144
    %v348 = vunpack.c.l.b16 %v145
    %v349 = vunpack.c.l.b16 %v146
    %v350 = vunpack.c.l.b16 %v147
    %v351 = vunpack.c.l.b16 %v148
    %v352 = vunpack.c.l.b16 %v149
    %v353 = vunpack.c.l.b16 %v150
    %v354 = vunpack.c.l.b16 %v151
    %v355 = vunpack.c.l.b16 %v152
    %v356 = vunpack.c.l.b16 %v153
    %v357 = vunpack.c.l.b16 %v154
    %v358 = vunpack.c.l.b16 %v155
    %v359 = vunpack.c.l.b16 %v156
    %v360 = vunpack.c.l.b16 %v157
    %v361 = vunpack.c.l.b16 %v158
    %v362 = vunpack.c.l.b16 %v159
    %v363 = vunpack.c.l.b16 %v160
    %v364 = vunpack.c.l.b16 %v161
    %v365 = vunpack.c.l.b16 %v162
    %v366 = vunpack.c.l.b16 %v163
    %v367 = vunpack.c.l.b16 %v164
    %v368 = vpack.c.b16 %v271, %v270
    %v369 = vpack.c.b16 %v273, %v272
    %v370 = vpack.c.b16 %v275, %v274
    %v371 = vpack.c.b16 %v277, %v276
    %v372 = vpack.c.b16 %v279, %v278
    %v373 = vpack.c.b16 %v281, %v280
    %v374 = vpack.c.b16 %v283, %v282
    %v375 = vpack.c.b16 %v285, %v284
    %v376 = vpack.c.b16 %v287, %v286
    %v377 = vpack.c.b16 %v289, %v288
    %v378 = vpack.c.b16 %v291, %v290
    %v379 = vpack.c.b16 %v293, %v292
    %v380 = vpack.c.b16 %v295, %v294
    %v381 = vpack.c.b16 %v297, %v296
    %v382 = vpack.c.b16 %v299, %v298
    %v383 = vpack.c.b16 %v301, %v300
    %v384 = vpack.c.b16 %v303, %v302
    %v385 = vpack.c.b16 %v305, %v304
    %v386 = vpack.c.b16 %v307, %v306
    %v387 = vpack.c.b16 %v309, %v308
    %v388 = vpack.c.b16 %v311, %v310
    %v389 = vpack.c.b16 %v313, %v312
    %v390 = vpack.c.b16 %v315, %v314
    %v391 = vpack.c.b16 %v317, %v316
    %v392 = vpack.c.b16 %v319, %v318
    %v393 = vpack.c.b16 %v321, %v320
    %v394 = vpack.c.b16 %v323, %v322
    %v395 = vpack.c.b16 %v325, %v324
    %v396 = vpack.c.b16 %v327, %v326
    %v397 = vpack.c.b16 %v329, %v328
    %v398 = vpack.c.b16 %v331, %v330
    %v399 = vpack.c.b16 %v333, %v332
    %v400 = vpack.c.b16 %v335, %v334
    %v401 = vpack.c.b16 %v337, %v336
    %v402 = vpack.c.b16 %v339, %v338
    %v403 = vpack.c.b16 %v341, %v340
    %v404 = vpack.c.b16 %v343, %v342
    %v405 = vpack.c.b16 %v345, %v344
    %v406 = vpack.c.b16 %v347, %v346
    %v407 = vpack.c.b16 %v349, %v348
    %v408 = vpack.c.b16 %v351, %v350
    %v409 = vpack.c.b16 %v353, %v352
    %v410 = vpack.c.b16 %v355, %v354
    %v411 = vpack.c.b16 %v357, %v356
    %v412 = vpack.c.b16 %v359, %v358
    %v413 = vpack.c.b16 %v361, %v360
    %v414 = vpack.c.b16 %v363, %v362
    %v415 = vpack.c.b16 %v365, %v364
    %v416 = vpack.c.b16 %v367, %v366
    %vm466 = vcmask 130048
    %v468 = vsel %vm466, %v66, 0
    %470 = vmatprep.subr.bf16.mxu0 0
    %471 = vmatpush1.bf16.msra.mxu0 %v368
    %472 = vmatprep.subr.bf16.mxu0 0
    %473 = vmatpush1.bf16.msra.mxu0 %v369
    %474 = vmatprep.subr.bf16.mxu0 0
    %475 = vmatpush1.bf16.msra.mxu0 %v370
    %476 = vmatprep.subr.bf16.mxu0 0
    %477 = vmatpush1.bf16.msra.mxu0 %v371
    %478 = vmatprep.subr.bf16.mxu0 0
    %479 = vmatpush1.bf16.msra.mxu0 %v372
    %480 = vmatprep.subr.bf16.mxu0 0
    %481 = vmatpush1.bf16.msra.mxu0 %v373
    %482 = vmatprep.subr.bf16.mxu0 0
    %483 = vmatpush1.bf16.msra.mxu0 %v374
    %484 = vmatprep.subr.bf16.mxu0 0
    %485 = vmatpush1.bf16.msra.mxu0 %v375
    %486 = vmatprep.subr.bf16.mxu0 0
    %487 = vmatpush1.bf16.msra.mxu0 %v376
    %488 = vmatprep.subr.bf16.mxu0 0
    %489 = vmatpush1.bf16.msra.mxu0 %v377
    %490 = vmatprep.subr.bf16.mxu0 0
    %491 = vmatpush1.bf16.msra.mxu0 %v378
    %492 = vmatprep.subr.bf16.mxu0 0
    %493 = vmatpush1.bf16.msra.mxu0 %v379
    %494 = vmatprep.subr.bf16.mxu0 0
    %495 = vmatpush1.bf16.msra.mxu0 %v380
    %496 = vmatprep.subr.bf16.mxu0 0
    %497 = vmatpush1.bf16.msra.mxu0 %v381
    %498 = vmatprep.subr.bf16.mxu0 0
    %499 = vmatpush1.bf16.msra.mxu0 %v382
    %500 = vmatprep.subr.bf16.mxu0 0
    %501 = vmatpush1.bf16.msra.mxu0 %v383
    %502 = vmatprep.mubr.bf16.mxu0 %v61
    %503 = vmatmul.mubr.bf16.gmra.mrb[0].mxu0 %v60
    %v504 = vpop.f32.mrb[0].mxu0
    %v505 = vadd.f32 %v170, %v504
    %v506 = vpop.f32.mrb[0].mxu0
    %v507 = vpop.f32.mrb[0].mxu0
    %v508 = vpop.f32.mrb[0].mxu0
    %509 = vdwg.mxu0
    %510 = vmatprep.subr.bf16.mxu0 0
    %511 = vmatpush1.bf16.msra.mxu0 %v384
    %512 = vmatprep.subr.bf16.mxu0 0
    %513 = vmatpush1.bf16.msra.mxu0 %v385
    %514 = vmatprep.subr.bf16.mxu0 0
    %515 = vmatpush1.bf16.msra.mxu0 %v386
    %516 = vmatprep.subr.bf16.mxu0 0
    %517 = vmatpush1.bf16.msra.mxu0 %v387
    %518 = vmatprep.subr.bf16.mxu0 0
    %519 = vmatpush1.bf16.msra.mxu0 %v388
    %520 = vmatprep.subr.bf16.mxu0 0
    %521 = vmatpush1.bf16.msra.mxu0 %v389
    %522 = vmatprep.subr.bf16.mxu0 0
    %523 = vmatpush1.bf16.msra.mxu0 %v390
    %524 = vmatprep.subr.bf16.mxu0 0
    %525 = vmatpush1.bf16.msra.mxu0 %v391
    %526 = vmatprep.subr.bf16.mxu0 0
    %527 = vmatpush1.bf16.msra.mxu0 %v392
    %528 = vmatprep.subr.bf16.mxu0 0
    %529 = vmatpush1.bf16.msra.mxu0 %v393
    %530 = vmatprep.subr.bf16.mxu0 0
    %531 = vmatpush1.bf16.msra.mxu0 %v394
    %532 = vmatprep.subr.bf16.mxu0 0
    %533 = vmatpush1.bf16.msra.mxu0 %v395
    %534 = vmatprep.subr.bf16.mxu0 0
    %535 = vmatpush1.bf16.msra.mxu0 %v396
    %536 = vmatprep.subr.bf16.mxu0 0
    %537 = vmatpush1.bf16.msra.mxu0 %v397
    %538 = vmatprep.subr.bf16.mxu0 0
    %539 = vmatpush1.bf16.msra.mxu0 %v398
    %540 = vmatprep.subr.bf16.mxu0 0
    %541 = vmatpush1.bf16.msra.mxu0 %v399
    %542 = vmatprep.mubr.bf16.mxu0 %v63
    %543 = vmatmul.mubr.bf16.gmra.mrb[0].mxu0 %v62
    %v544 = vpop.f32.mrb[0].mxu0
    %v545 = vadd.f32 %v505, %v544
    %v546 = vpop.f32.mrb[0].mxu0
    %v547 = vpop.f32.mrb[0].mxu0
    %v548 = vpop.f32.mrb[0].mxu0
    %549 = vdwg.mxu0
    %550 = vmatprep.subr.bf16.mxu0 0
    %551 = vmatpush1.bf16.msra.mxu0 %v400
    %552 = vmatprep.subr.bf16.mxu0 0
    %553 = vmatpush1.bf16.msra.mxu0 %v401
    %554 = vmatprep.subr.bf16.mxu0 0
    %555 = vmatpush1.bf16.msra.mxu0 %v402
    %556 = vmatprep.subr.bf16.mxu0 0
    %557 = vmatpush1.bf16.msra.mxu0 %v403
    %558 = vmatprep.subr.bf16.mxu0 0
    %559 = vmatpush1.bf16.msra.mxu0 %v404
    %560 = vmatprep.subr.bf16.mxu0 0
    %561 = vmatpush1.bf16.msra.mxu0 %v405
    %562 = vmatprep.subr.bf16.mxu0 0
    %563 = vmatpush1.bf16.msra.mxu0 %v406
    %564 = vmatprep.subr.bf16.mxu0 0
    %565 = vmatpush1.bf16.msra.mxu0 %v407
    %566 = vmatprep.subr.bf16.mxu0 0
    %567 = vmatpush1.bf16.msra.mxu0 %v408
    %568 = vmatprep.subr.bf16.mxu0 0
    %569 = vmatpush1.bf16.msra.mxu0 %v409
    %570 = vmatprep.subr.bf16.mxu0 0
    %571 = vmatpush1.bf16.msra.mxu0 %v410
    %572 = vmatprep.subr.bf16.mxu0 0
    %573 = vmatpush1.bf16.msra.mxu0 %v411
    %574 = vmatprep.subr.bf16.mxu0 0
    %575 = vmatpush1.bf16.msra.mxu0 %v412
    %576 = vmatprep.subr.bf16.mxu0 0
    %577 = vmatpush1.bf16.msra.mxu0 %v413
    %578 = vmatprep.subr.bf16.mxu0 0
    %579 = vmatpush1.bf16.msra.mxu0 %v414
    %580 = vmatprep.subr.bf16.mxu0 0
    %581 = vmatpush1.bf16.msra.mxu0 %v415
    %582 = vmatprep.mubr.bf16.mxu0 %v65
    %583 = vmatmul.mubr.bf16.gmra.mrb[0].mxu0 %v64
    %v584 = vpop.f32.mrb[0].mxu0
    %v585 = vadd.f32 %v545, %v584
    %v586 = vpop.f32.mrb[0].mxu0
    %v587 = vpop.f32.mrb[0].mxu0
    %v588 = vpop.f32.mrb[0].mxu0
    %589 = vdwg.mxu0
    %590 = vmatprep.subr.bf16.mxu0 0
    %591 = vmatpush1.bf16.msra.mxu0 %v416
    %592 = vmatprep.subr.bf16.mxu0 0
    %593 = vmatpush1.bf16.msra.mxu0 0
    %594 = vmatprep.subr.bf16.mxu0 0
    %595 = vmatpush1.bf16.msra.mxu0 0
    %596 = vmatprep.subr.bf16.mxu0 0
    %597 = vmatpush1.bf16.msra.mxu0 0
    %598 = vmatprep.subr.bf16.mxu0 0
    %599 = vmatpush1.bf16.msra.mxu0 0
    %600 = vmatprep.subr.bf16.mxu0 0
    %601 = vmatpush1.bf16.msra.mxu0 0
    %602 = vmatprep.subr.bf16.mxu0 0
    %603 = vmatpush1.bf16.msra.mxu0 0
    %604 = vmatprep.subr.bf16.mxu0 0
    %605 = vmatpush1.bf16.msra.mxu0 0
    %606 = vmatprep.subr.bf16.mxu0 0
    %607 = vmatpush1.bf16.msra.mxu0 0
    %608 = vmatprep.subr.bf16.mxu0 0
    %609 = vmatpush1.bf16.msra.mxu0 0
    %610 = vmatprep.subr.bf16.mxu0 0
    %611 = vmatpush1.bf16.msra.mxu0 0
    %612 = vmatprep.subr.bf16.mxu0 0
    %613 = vmatpush1.bf16.msra.mxu0 0
    %614 = vmatprep.subr.bf16.mxu0 0
    %615 = vmatpush1.bf16.msra.mxu0 0
    %616 = vmatprep.subr.bf16.mxu0 0
    %617 = vmatpush1.bf16.msra.mxu0 0
    %618 = vmatprep.subr.bf16.mxu0 0
    %619 = vmatpush1.bf16.msra.mxu0 0
    %620 = vmatprep.subr.bf16.mxu0 0
    %621 = vmatpush1.bf16.msra.mxu0 0
    %622 = vmatprep.mubr.bf16.mxu0 0
    %623 = vmatmul.mubr.bf16.gmra.mrb[0].mxu0 %v468
    %v624 = vpop.f32.mrb[0].mxu0
    %v625 = vadd.f32 %v585, %v624
    %v626 = vpop.f32.mrb[0].mxu0
    %v627 = vpop.f32.mrb[0].mxu0
    %v628 = vpop.f32.mrb[0].mxu0
    %629 = vdwg.mxu0
    %v630 = vmax.f32 %v625, 0.0
    %vm631 = vcmask 156672
    %v632 = vsel %vm631, %v630, -inf
    %633 = vmax.xlane.f32.xlu0 %v632
    %v634 = vpop.xlane.xlu0 %633
    %v635 = vsub.f32 %v630, %v634
    %v636 = vmul.f32 %v635, 1.442695
    %v637 = vpow.pop %v636
    %v638 = vsel %vm631, %v637, 0.0
    %639 = vadd.xlane.f32.xlu0 %v638
    %v640 = vpop.xlane.xlu0 %639
    %v641 = vlog2.pop %v640
    %v642 = vmul.f32 %v641, 0.6931472
    %v643 = vsub.f32 %v635, %v642
    %644 = vst.msk [vmem:[#allocation2] sm:$0x3] %vm631, %v643
    // Predicated region
    $region14: #{fcnet_forward.1} parent=1 // pred_check
      _
    $region15: #{fcnet_forward.1} parent=1 // pred_check_branch
      %646 = sbr.rel (0) target = $region17
    $region16: #{fcnet_forward.1} parent=1 // pred_region
      %s648 = ssub.s32 32, 32
      %649 = vsyncadd [#allocation3], %s648
      %s651 = sshll.u32 [#allocation2], 4
      %s652 = int_to_ptr.vmem [resolvable:$true] %s651
      %654 = dma.vmem_to_hbm [thread:$0]  %s652, 32, %s3, [#allocation3]
    $region17: #{fcnet_forward.1} parent=1 // pred_fallthru
      _
    // Predicated region
    $region18: #{fcnet_forward.1} parent=1 // pred_check
      _
    $region19: #{fcnet_forward.1} parent=1 // pred_check_branch
      %656 = sbr.rel (0) target = $region21
    $region20: #{fcnet_forward.1} parent=1 // pred_region
      %657 = dma.done [#allocation3], 32
    $region21: #{fcnet_forward.1} parent=1 // pred_fallthru
      _
    %658 = vsyncpa [#allocation3], 1

</llo_original>
